<compile_context>
chip_gen: v6e
topology: v6e:2x2x1
jax: 0.10.0
libtpu: 0.0.40
codegen_flags: <defaults>
</compile_context>

<pallas_src>
import functools

import jax
import jax.numpy as jnp
import numpy as np
from jax.experimental import pallas as pl
from jax.experimental.pallas import tpu as pltpu


def _round_up(x, m):
    return ((x + m - 1) // m) * m


def _has_two_tensorcores():
    # v7x is 2 TensorCores / chip; the grid is the only thing sharding work across
    # them, so we keep 2 "parallel" grid steps there and 1 step everywhere else.
    try:
        kind = jax.devices()[0].device_kind.lower()
    except Exception:
        return False
    return ("v7" in kind) or ("tpu7" in kind)


# ----------------------------------------------------------------------------
# Fused forward kernel: one grid step per BB-sized batch slab.
#
# Layout: the trunk activation is channel-major, h[channel, b*HW + position];
# the 3x3 'same' conv is a single (Ch, 9*Cin) @ (9*Cin, BB*HW) matmul over an
# in-VMEM patch slab assembled from 9 shifted slices of the zero-padded,
# spatially flattened input (left/right wrap masked).  The two 1x1 head convs
# collapse into one (3, Ch) matmul, and the FC heads contract against weight
# slabs pre-permuted to this layout (torch.flatten(NCHW) ordering baked in).
# ----------------------------------------------------------------------------
def _fused_forward_kernel(x_ref, w_ref, b_ref, out_ref, *,
                          W, HW, pad, BB, Cin, Ch, off):
    f32 = jnp.float32
    bf16 = jnp.bfloat16

    masks = b_ref[off["mask"]:off["mask"] + 2, 0:HW]          # (2, HW) f32
    xw = [x_ref[b] for b in range(BB)]                        # each (Cin, L) f32

    # ---- in-VMEM im2col: patch slab (9*Cin, BB*HW), batch folded onto lanes ----
    rows = []
    for di in (-1, 0, 1):
        for dj in (-1, 0, 1):
            s = pad + di * W + dj                             # static window start
            pieces = []
            for b in range(BB):
                xs = xw[b][:, s:s + HW]                       # (Cin, HW)
                if dj == -1:
                    xs = xs * masks[0:1, :]                   # zero left-border wrap
                elif dj == 1:
                    xs = xs * masks[1:2, :]                   # zero right-border wrap
                pieces.append(xs)
            rows.append(pieces[0] if BB == 1 else jnp.concatenate(pieces, axis=1))
    patches = jnp.concatenate(rows, axis=0).astype(bf16)      # (9*Cin, BB*HW)

    # ---- trunk: fused 3x3 conv (single K=9*Cin matmul) + bias + ReLU -----------
    wc = w_ref[off["wc"]:off["wc"] + Ch, 0:9 * Cin]           # (Ch, 9*Cin) bf16
    bc = b_ref[off["bc"]:off["bc"] + Ch, 0:1]                 # (Ch, 1) f32
    h = jnp.dot(wc, patches, preferred_element_type=f32) + bc
    h = jnp.maximum(h, 0.0)                                   # (Ch, BB*HW) f32

    # ---- merged 1x1 convs: rows 0-1 = policy conv, row 2 = value conv ----------
    whv = w_ref[off["whv"]:off["whv"] + 3, 0:Ch]              # (3, Ch) bf16
    bhv = b_ref[off["bhv"]:off["bhv"] + 3, 0:1]               # (3, 1) f32
    hv = jnp.dot(whv, h.astype(bf16), preferred_element_type=f32) + bhv
    hv = jnp.maximum(hv, 0.0)                                 # (3, BB*HW) f32
    hvb = hv.astype(bf16)

    # ---- heads: value output baked into the policy lane padding at column P ----
    wp = w_ref[off["wp"]:off["wp"] + 2 * HW, :]               # (2*HW, PPV) bf16
    wv1 = w_ref[off["wv1"]:off["wv1"] + HW, 0:Ch]             # (HW, Ch) bf16
    wv2 = w_ref[off["wv2"]:off["wv2"] + Ch, :]                # (Ch, PPV) bf16
    bp = b_ref[off["bp"]:off["bp"] + 1, :]                    # (1, PPV) f32
    bv1 = b_ref[off["bv1"]:off["bv1"] + 1, 0:Ch]              # (1, Ch) f32
    bv2 = b_ref[off["bv2"]:off["bv2"] + 1, :]                 # (1, PPV) f32

    for b in range(BB):
        hv0 = hvb[0:1, b * HW:(b + 1) * HW]                   # (1, HW)
        hv1 = hvb[1:2, b * HW:(b + 1) * HW]
        hv2 = hvb[2:3, b * HW:(b + 1) * HW]
        # Policy over torch.flatten (c, h, w) ordering; lanes >= P are exactly 0.
        pol = (jnp.dot(hv0, wp[0:HW, :], preferred_element_type=f32)
               + jnp.dot(hv1, wp[HW:2 * HW, :], preferred_element_type=f32)
               + bp)                                          # (1, PPV)
        # Value head; wv2/bv2 were pre-shifted so the result lands at lane P and
        # every other lane is exactly tanh(0) = 0.
        v1 = jnp.maximum(jnp.dot(hv2, wv1, preferred_element_type=f32) + bv1, 0.0)
        val = jnp.tanh(jnp.dot(v1.astype(bf16), wv2, preferred_element_type=f32) + bv2)
        out_ref[b] = (pol + val).astype(out_ref.dtype)        # (1, PPV)


def _fused_forward(wslab, bslab, x_nchw, *, H, W, Cin, Ch, P, PPV, off, two_cores):
    B = x_nchw.shape[0]
    HW = H * W
    pad = W + 1
    L = HW + 2 * pad
    G = 2 if (two_cores and B >= 2 and B % 2 == 0) else 1     # v7x: one step per TC
    BB = B // G

    # Only prep glue left: channel-major spatial flatten + zero pad (tiny).
    xsp = jnp.pad(x_nchw.astype(jnp.float32).reshape(B, Cin, HW),
                  ((0, 0), (0, 0), (pad, pad)))               # (B, Cin, L)

    kernel = functools.partial(_fused_forward_kernel, W=W, HW=HW, pad=pad,
                               BB=BB, Cin=Cin, Ch=Ch, off=off)

    flops = 2 * B * (9 * Cin * Ch * HW + 3 * Ch * HW + 2 * HW * PPV + HW * Ch + Ch * PPV)
    bytes_accessed = int(4 * B * Cin * L + 2 * wslab.size + 4 * bslab.size + 4 * B * PPV)

    out = pl.pallas_call(
        kernel,
        out_shape=jax.ShapeDtypeStruct((B, 1, PPV), jnp.float32),
        grid=(G,),
        in_specs=[
            pl.BlockSpec((BB, Cin, L), lambda g: (g, 0, 0)),   # BB-sized input slab
            pl.BlockSpec(wslab.shape, lambda g: (0, 0)),       # bf16 weight slab
            pl.BlockSpec(bslab.shape, lambda g: (0, 0)),       # f32 bias/mask slab
        ],
        out_specs=pl.BlockSpec((BB, 1, PPV), lambda g: (g, 0, 0)),
        compiler_params=pltpu.CompilerParams(
            dimension_semantics=("parallel",),
            vmem_limit_bytes=32 * 1024 * 1024),
        cost_estimate=pl.CostEstimate(flops=flops, transcendentals=B * PPV,
                                      bytes_accessed=bytes_accessed),
    )(xsp, wslab, bslab)

    out = out.reshape(B, PPV)
    return out[:, :P], out[:, P:P + 1]                         # (B, P), (B, 1)


# ----------------------------------------------------------------------------
# Pure-JAX reference (for correctness checking only; no Pallas).
# ----------------------------------------------------------------------------
def _reference_forward(params, x_nchw):
    x = jnp.transpose(x_nchw.astype(jnp.float32), (0, 2, 3, 1))       # NHWC
    B, H, W, C = x.shape
    xp = jnp.pad(x, ((0, 0), (1, 1), (1, 1), (0, 0)))
    cols = [xp[:, i:i + H, j:j + W, :] for i in range(3) for j in range(3)]
    patches = jnp.stack(cols, axis=3).reshape(B * H * W, 9 * C)
    wm = jnp.transpose(params["conv_w"], (2, 3, 1, 0)).reshape(9 * C, -1)
    h = jnp.maximum(patches @ wm + params["conv_b"], 0.0).reshape(B, H, W, -1)
    ph = jnp.maximum(jnp.einsum("bhwc,oc->bhwo", h, params["pconv_w"].reshape(2, -1))
                     + params["pconv_b"], 0.0)
    vh = jnp.maximum(jnp.einsum("bhwc,oc->bhwo", h, params["vconv_w"].reshape(1, -1))
                     + params["vconv_b"], 0.0)
    pf = jnp.transpose(ph, (0, 3, 1, 2)).reshape(B, -1)               # torch.flatten(NCHW)
    vf = jnp.transpose(vh, (0, 3, 1, 2)).reshape(B, -1)
    policy = pf @ params["pfc_w"] + params["pfc_b"]
    v1 = jnp.maximum(vf @ params["vfc1_w"] + params["vfc1_b"], 0.0)
    value = jnp.tanh(v1 @ params["vfc2_w"] + params["vfc2_b"])
    return policy, value


# ----------------------------------------------------------------------------
# Concrete game-specific model (AlphaZero-style board net) — the abstract
# GameSpecificModel made concrete so the router has something to dispatch to.
# ----------------------------------------------------------------------------
class DefaultBoardGameModel:
    def __init__(self, game_name, in_channels, board_size, hidden, policy_size, key):
        self.game_name = game_name
        self.policy_size = policy_size
        self.in_channels = in_channels
        self.board_size = board_size
        self.hidden = hidden

        H = W = board_size
        HW = H * W
        Cin, Ch, P = in_channels, hidden, policy_size
        ks = jax.random.split(key, 6)
        s = 0.05
        # PyTorch-layout parameters (kept for the pure-JAX reference).
        self.params = {
            "conv_w": s * jax.random.normal(ks[0], (Ch, Cin, 3, 3), jnp.float32),
            "conv_b": jnp.zeros((Ch,), jnp.float32),
            "pconv_w": s * jax.random.normal(ks[1], (2, Ch, 1, 1), jnp.float32),
            "pconv_b": jnp.zeros((2,), jnp.float32),
            "pfc_w": s * jax.random.normal(ks[2], (2 * HW, P), jnp.float32),
            "pfc_b": jnp.zeros((P,), jnp.float32),
            "vconv_w": s * jax.random.normal(ks[3], (1, Ch, 1, 1), jnp.float32),
            "vconv_b": jnp.zeros((1,), jnp.float32),
            "vfc1_w": s * jax.random.normal(ks[4], (HW, Ch), jnp.float32),
            "vfc1_b": jnp.zeros((Ch,), jnp.float32),
            "vfc2_w": s * jax.random.normal(ks[5], (Ch, 1), jnp.float32),
            "vfc2_b": jnp.zeros((1,), jnp.float32),
        }

        # Kernel-layout slabs: all permutation / merging / lane padding done once,
        # so the runtime kernel never transposes or flattens anything.
        PPV = _round_up(P + 1, 128)      # lane-dense output: policy [0:P], value at P
        self._P, self._PPV = P, PPV
        WS = PPV

        p = {k: np.asarray(v) for k, v in self.params.items()}

        off = {"wp": 0, "wv1": 2 * HW, "wv2": 3 * HW, "wc": 3 * HW + Ch,
               "whv": 3 * HW + 2 * Ch,
               "mask": 0, "bp": 2, "bv2": 3, "bv1": 4, "bc": 8, "bhv": 8 + Ch}
        RW = _round_up(3 * HW + 2 * Ch + 3, 8)
        RB = _round_up(8 + Ch + 3, 8)

        wslab = np.zeros((RW, WS), np.float32)
        wslab[off["wp"]:off["wp"] + 2 * HW, :P] = p["pfc_w"]
        wslab[off["wv1"]:off["wv1"] + HW, :Ch] = p["vfc1_w"]
        wslab[off["wv2"]:off["wv2"] + Ch, P] = p["vfc2_w"][:, 0]      # value at lane P
        wslab[off["wc"]:off["wc"] + Ch, :9 * Cin] = (
            p["conv_w"].transpose(0, 2, 3, 1).reshape(Ch, 9 * Cin))
        wslab[off["whv"]:off["whv"] + 2, :Ch] = p["pconv_w"].reshape(2, Ch)
        wslab[off["whv"] + 2, :Ch] = p["vconv_w"].reshape(Ch)

        col = np.arange(HW) % W
        bslab = np.zeros((RB, WS), np.float32)
        bslab[off["mask"], :HW] = (col != 0)           # left-border mask (dj == -1)
        bslab[off["mask"] + 1, :HW] = (col != W - 1)   # right-border mask (dj == +1)
        bslab[off["bp"], :P] = p["pfc_b"]
        bslab[off["bv2"], P] = p["vfc2_b"][0]
        bslab[off["bv1"], :Ch] = p["vfc1_b"]
        bslab[off["bc"]:off["bc"] + Ch, 0] = p["conv_b"]
        bslab[off["bhv"]:off["bhv"] + 2, 0] = p["pconv_b"]
        bslab[off["bhv"] + 2, 0] = p["vconv_b"][0]

        self.wslab = jnp.asarray(wslab, jnp.bfloat16)  # bf16 halves the weight DMA
        self.bslab = jnp.asarray(bslab, jnp.float32)   # masks/biases stay f32 (VPU path)

        self._forward = jax.jit(functools.partial(
            _fused_forward, H=H, W=W, Cin=Cin, Ch=Ch, P=P, PPV=PPV, off=off,
            two_cores=_has_two_tensorcores()))

    def get_input_shape(self):
        return (self.in_channels, self.board_size, self.board_size)

    def get_output_sizes(self):
        return (self.policy_size, 1)

    def __call__(self, x_nchw):
        return self._forward(self.wslab, self.bslab, x_nchw)


# ----------------------------------------------------------------------------
# MultiGameModel: routes forward() to the registered game-specific model.
# ----------------------------------------------------------------------------
class MultiGameModel:
    def __init__(self):
        self.game_models = {}
        self.default_game = None

    def add_game_model(self, model, game_name=None):
        if game_name is None:
            game_name = model.game_name
        self.game_models[game_name] = model
        if self.default_game is None:
            self.default_game = game_name

    def get_game_model(self, game_name=None):
        if game_name is None:
            game_name = self.default_game
        if game_name not in self.game_models:
            if self.default_game is not None:
                return self.game_models[self.default_game]
            raise ValueError(f"No model found for game '{game_name}' and no default model set")
        return self.game_models[game_name]

    def create_inference_preprocessor(self, game_name=None):
        # TODO(synk): torch.tensor conversion replaced by jnp.asarray; states must
        # expose encode()/encode_for_inference() as in the original module.
        _ = self.get_game_model(game_name)

        def preprocessor(state):
            encoded = (state.encode_for_inference()
                       if hasattr(state, "encode_for_inference") else state.encode())
            return jnp.asarray(encoded, dtype=jnp.float32)
        return preprocessor

    def forward(self, x, game_name=None):
        return self.get_game_model(game_name)(x)

    def __call__(self, x, game_name=None):
        return self.forward(x, game_name)


# ----------------------------------------------------------------------------
if __name__ == "__main__":
    key = jax.random.PRNGKey(0)
    k_param, k_input = jax.random.split(key)

    B, C, H, W = 2, 4, 8, 8
    hidden, policy_size = 32, 64

    multi = MultiGameModel()
    multi.add_game_model(
        DefaultBoardGameModel("default_board", in_channels=C, board_size=H,
                              hidden=hidden, policy_size=policy_size, key=k_param))

    x = jax.random.normal(k_input, (B, C, H, W), jnp.float32)   # layout: NCHW

    policy, value = multi(x)                     # routes to the default game model
    policy = jax.block_until_ready(policy)
    value = jax.block_until_ready(value)

    assert policy.shape == (B, policy_size), policy.shape
    assert value.shape == (B, 1), value.shape
    assert bool(jnp.all(jnp.isfinite(policy))) and bool(jnp.all(jnp.isfinite(value)))

    # Correctness: fused Pallas kernel (bf16 operands, f32 accum) vs. f32 reference.
    ref_policy, ref_value = _reference_forward(multi.get_game_model().params, x)
    np.testing.assert_allclose(np.asarray(policy), np.asarray(ref_policy), rtol=5e-3, atol=5e-3)
    np.testing.assert_allclose(np.asarray(value), np.asarray(ref_value), rtol=5e-3, atol=5e-3)

    print("KERNEL_OK")
</pallas_src>

<mosaic_0001>
module attributes {stable_mosaic.version = 11 : i64} {
  func.func @_fused_forward_kernel(%arg0: i32, %arg1: memref<2x4x82xf32, #tpu.memory_space<vmem>>, %arg2: memref<264x128xbf16, #tpu.memory_space<vmem>>, %arg3: memref<48x128xf32, #tpu.memory_space<vmem>>, %arg4: memref<2x1x128xf32, #tpu.memory_space<vmem>>) attributes {dimension_semantics = [#tpu.dimension_semantics<parallel>], iteration_bounds = array<i64: 1>, scalar_prefetch = 0 : i64, scratch_operands = 0 : i64, tpu.core_type = #tpu.core_type<tc>, window_params = [{transform_indices = @transform_0, window_bounds = array<i64: 2, 4, 82>}, {pipeline_mode = #tpu.pipeline_mode<synchronous>, transform_indices = @transform_1, window_bounds = array<i64: 264, 128>}, {pipeline_mode = #tpu.pipeline_mode<synchronous>, transform_indices = @transform_2, window_bounds = array<i64: 48, 128>}, {transform_indices = @transform_3, window_bounds = array<i64: 2, 1, 128>}]} {
    %c0 = arith.constant 0 : index
    %c0_0 = arith.constant 0 : index
    %0 = vector.load %arg3[%c0, %c0_0] : memref<48x128xf32, #tpu.memory_space<vmem>>, vector<2x64xf32>
    %c0_1 = arith.constant 0 : index
    %c0_2 = arith.constant 0 : index
    %c0_3 = arith.constant 0 : index
    %1 = vector.load %arg1[%c0_1, %c0_2, %c0_3] : memref<2x4x82xf32, #tpu.memory_space<vmem>>, vector<1x4x82xf32>
    %2 = vector.shape_cast %1 : vector<1x4x82xf32> to vector<4x82xf32>
    %c1 = arith.constant 1 : index
    %c0_4 = arith.constant 0 : index
    %c0_5 = arith.constant 0 : index
    %3 = vector.load %arg1[%c1, %c0_4, %c0_5] : memref<2x4x82xf32, #tpu.memory_space<vmem>>, vector<1x4x82xf32>
    %4 = vector.shape_cast %3 : vector<1x4x82xf32> to vector<4x82xf32>
    %5 = vector.extract_strided_slice %2 {offsets = [0, 0], sizes = [4, 64], strides = [1, 1]} : vector<4x82xf32> to vector<4x64xf32>
    %6 = vector.extract_strided_slice %0 {offsets = [0, 0], sizes = [1, 64], strides = [1, 1]} : vector<2x64xf32> to vector<1x64xf32>
    %7 = vector.broadcast %6 : vector<1x64xf32> to vector<4x64xf32>
    %8 = arith.mulf %5, %7 : vector<4x64xf32>
    %9 = vector.extract_strided_slice %4 {offsets = [0, 0], sizes = [4, 64], strides = [1, 1]} : vector<4x82xf32> to vector<4x64xf32>
    %10 = vector.extract_strided_slice %0 {offsets = [0, 0], sizes = [1, 64], strides = [1, 1]} : vector<2x64xf32> to vector<1x64xf32>
    %11 = vector.broadcast %10 : vector<1x64xf32> to vector<4x64xf32>
    %12 = arith.mulf %9, %11 : vector<4x64xf32>
    %13 = tpu.concatenate %8, %12 in 1 : vector<4x64xf32>, vector<4x64xf32> -> vector<4x128xf32>
    %14 = vector.extract_strided_slice %2 {offsets = [0, 1], sizes = [4, 64], strides = [1, 1]} : vector<4x82xf32> to vector<4x64xf32>
    %15 = vector.extract_strided_slice %4 {offsets = [0, 1], sizes = [4, 64], strides = [1, 1]} : vector<4x82xf32> to vector<4x64xf32>
    %16 = tpu.concatenate %14, %15 in 1 : vector<4x64xf32>, vector<4x64xf32> -> vector<4x128xf32>
    %17 = vector.extract_strided_slice %2 {offsets = [0, 2], sizes = [4, 64], strides = [1, 1]} : vector<4x82xf32> to vector<4x64xf32>
    %18 = vector.extract_strided_slice %0 {offsets = [1, 0], sizes = [1, 64], strides = [1, 1]} : vector<2x64xf32> to vector<1x64xf32>
    %19 = vector.broadcast %18 : vector<1x64xf32> to vector<4x64xf32>
    %20 = arith.mulf %17, %19 : vector<4x64xf32>
    %21 = vector.extract_strided_slice %4 {offsets = [0, 2], sizes = [4, 64], strides = [1, 1]} : vector<4x82xf32> to vector<4x64xf32>
    %22 = vector.extract_strided_slice %0 {offsets = [1, 0], sizes = [1, 64], strides = [1, 1]} : vector<2x64xf32> to vector<1x64xf32>
    %23 = vector.broadcast %22 : vector<1x64xf32> to vector<4x64xf32>
    %24 = arith.mulf %21, %23 : vector<4x64xf32>
    %25 = tpu.concatenate %20, %24 in 1 : vector<4x64xf32>, vector<4x64xf32> -> vector<4x128xf32>
    %26 = vector.extract_strided_slice %2 {offsets = [0, 8], sizes = [4, 64], strides = [1, 1]} : vector<4x82xf32> to vector<4x64xf32>
    %27 = vector.extract_strided_slice %0 {offsets = [0, 0], sizes = [1, 64], strides = [1, 1]} : vector<2x64xf32> to vector<1x64xf32>
    %28 = vector.broadcast %27 : vector<1x64xf32> to vector<4x64xf32>
    %29 = arith.mulf %26, %28 : vector<4x64xf32>
    %30 = vector.extract_strided_slice %4 {offsets = [0, 8], sizes = [4, 64], strides = [1, 1]} : vector<4x82xf32> to vector<4x64xf32>
    %31 = vector.extract_strided_slice %0 {offsets = [0, 0], sizes = [1, 64], strides = [1, 1]} : vector<2x64xf32> to vector<1x64xf32>
    %32 = vector.broadcast %31 : vector<1x64xf32> to vector<4x64xf32>
    %33 = arith.mulf %30, %32 : vector<4x64xf32>
    %34 = tpu.concatenate %29, %33 in 1 : vector<4x64xf32>, vector<4x64xf32> -> vector<4x128xf32>
    %35 = vector.extract_strided_slice %2 {offsets = [0, 9], sizes = [4, 64], strides = [1, 1]} : vector<4x82xf32> to vector<4x64xf32>
    %36 = vector.extract_strided_slice %4 {offsets = [0, 9], sizes = [4, 64], strides = [1, 1]} : vector<4x82xf32> to vector<4x64xf32>
    %37 = tpu.concatenate %35, %36 in 1 : vector<4x64xf32>, vector<4x64xf32> -> vector<4x128xf32>
    %38 = vector.extract_strided_slice %2 {offsets = [0, 10], sizes = [4, 64], strides = [1, 1]} : vector<4x82xf32> to vector<4x64xf32>
    %39 = vector.extract_strided_slice %0 {offsets = [1, 0], sizes = [1, 64], strides = [1, 1]} : vector<2x64xf32> to vector<1x64xf32>
    %40 = vector.broadcast %39 : vector<1x64xf32> to vector<4x64xf32>
    %41 = arith.mulf %38, %40 : vector<4x64xf32>
    %42 = vector.extract_strided_slice %4 {offsets = [0, 10], sizes = [4, 64], strides = [1, 1]} : vector<4x82xf32> to vector<4x64xf32>
    %43 = vector.extract_strided_slice %0 {offsets = [1, 0], sizes = [1, 64], strides = [1, 1]} : vector<2x64xf32> to vector<1x64xf32>
    %44 = vector.broadcast %43 : vector<1x64xf32> to vector<4x64xf32>
    %45 = arith.mulf %42, %44 : vector<4x64xf32>
    %46 = tpu.concatenate %41, %45 in 1 : vector<4x64xf32>, vector<4x64xf32> -> vector<4x128xf32>
    %47 = vector.extract_strided_slice %2 {offsets = [0, 16], sizes = [4, 64], strides = [1, 1]} : vector<4x82xf32> to vector<4x64xf32>
    %48 = vector.extract_strided_slice %0 {offsets = [0, 0], sizes = [1, 64], strides = [1, 1]} : vector<2x64xf32> to vector<1x64xf32>
    %49 = vector.broadcast %48 : vector<1x64xf32> to vector<4x64xf32>
    %50 = arith.mulf %47, %49 : vector<4x64xf32>
    %51 = vector.extract_strided_slice %4 {offsets = [0, 16], sizes = [4, 64], strides = [1, 1]} : vector<4x82xf32> to vector<4x64xf32>
    %52 = vector.extract_strided_slice %0 {offsets = [0, 0], sizes = [1, 64], strides = [1, 1]} : vector<2x64xf32> to vector<1x64xf32>
    %53 = vector.broadcast %52 : vector<1x64xf32> to vector<4x64xf32>
    %54 = arith.mulf %51, %53 : vector<4x64xf32>
    %55 = tpu.concatenate %50, %54 in 1 : vector<4x64xf32>, vector<4x64xf32> -> vector<4x128xf32>
    %56 = vector.extract_strided_slice %2 {offsets = [0, 17], sizes = [4, 64], strides = [1, 1]} : vector<4x82xf32> to vector<4x64xf32>
    %57 = vector.extract_strided_slice %4 {offsets = [0, 17], sizes = [4, 64], strides = [1, 1]} : vector<4x82xf32> to vector<4x64xf32>
    %58 = tpu.concatenate %56, %57 in 1 : vector<4x64xf32>, vector<4x64xf32> -> vector<4x128xf32>
    %59 = vector.extract_strided_slice %2 {offsets = [0, 18], sizes = [4, 64], strides = [1, 1]} : vector<4x82xf32> to vector<4x64xf32>
    %60 = vector.extract_strided_slice %0 {offsets = [1, 0], sizes = [1, 64], strides = [1, 1]} : vector<2x64xf32> to vector<1x64xf32>
    %61 = vector.broadcast %60 : vector<1x64xf32> to vector<4x64xf32>
    %62 = arith.mulf %59, %61 : vector<4x64xf32>
    %63 = vector.extract_strided_slice %4 {offsets = [0, 18], sizes = [4, 64], strides = [1, 1]} : vector<4x82xf32> to vector<4x64xf32>
    %64 = vector.extract_strided_slice %0 {offsets = [1, 0], sizes = [1, 64], strides = [1, 1]} : vector<2x64xf32> to vector<1x64xf32>
    %65 = vector.broadcast %64 : vector<1x64xf32> to vector<4x64xf32>
    %66 = arith.mulf %63, %65 : vector<4x64xf32>
    %67 = tpu.concatenate %62, %66 in 1 : vector<4x64xf32>, vector<4x64xf32> -> vector<4x128xf32>
    %68 = tpu.concatenate %13, %16, %25, %34, %37, %46, %55, %58, %67 in 0 : vector<4x128xf32>, vector<4x128xf32>, vector<4x128xf32>, vector<4x128xf32>, vector<4x128xf32>, vector<4x128xf32>, vector<4x128xf32>, vector<4x128xf32>, vector<4x128xf32> -> vector<36x128xf32>
    %69 = arith.truncf %68 : vector<36x128xf32> to vector<36x128xbf16>
    %c224 = arith.constant 224 : index
    %c0_6 = arith.constant 0 : index
    %70 = vector.load %arg2[%c224, %c0_6] : memref<264x128xbf16, #tpu.memory_space<vmem>>, vector<32x36xbf16>
    %c8 = arith.constant 8 : index
    %c0_7 = arith.constant 0 : index
    %71 = vector.load %arg3[%c8, %c0_7] : memref<48x128xf32, #tpu.memory_space<vmem>>, vector<32x1xf32>
    %cst = arith.constant dense<0.000000e+00> : vector<32x128xf32>
    %72 = tpu.matmul %70, %69, %cst {dimension_numbers = #tpu.dot_dimension_numbers<[1], [0], [0], [1], [0, 0, 1, 1], [], []>} : vector<32x36xbf16>, vector<36x128xbf16>, vector<32x128xf32> -> vector<32x128xf32>
    %73 = vector.broadcast %71 : vector<32x1xf32> to vector<32x128xf32>
    %74 = arith.addf %72, %73 : vector<32x128xf32>
    %cst_8 = arith.constant 0.000000e+00 : f32
    %75 = vector.broadcast %cst_8 : f32 to vector<32x128xf32>
    %76 = arith.maximumf %74, %75 : vector<32x128xf32>
    %c256 = arith.constant 256 : index
    %c0_9 = arith.constant 0 : index
    %77 = vector.load %arg2[%c256, %c0_9] : memref<264x128xbf16, #tpu.memory_space<vmem>>, vector<3x32xbf16>
    %c40 = arith.constant 40 : index
    %c0_10 = arith.constant 0 : index
    %78 = vector.load %arg3[%c40, %c0_10] : memref<48x128xf32, #tpu.memory_space<vmem>>, vector<3x1xf32>
    %79 = arith.truncf %76 : vector<32x128xf32> to vector<32x128xbf16>
    %cst_11 = arith.constant dense<0.000000e+00> : vector<3x128xf32>
    %80 = tpu.matmul %77, %79, %cst_11 {dimension_numbers = #tpu.dot_dimension_numbers<[1], [0], [0], [1], [0, 0, 1, 1], [], []>} : vector<3x32xbf16>, vector<32x128xbf16>, vector<3x128xf32> -> vector<3x128xf32>
    %81 = vector.broadcast %78 : vector<3x1xf32> to vector<3x128xf32>
    %82 = arith.addf %80, %81 : vector<3x128xf32>
    %cst_12 = arith.constant 0.000000e+00 : f32
    %83 = vector.broadcast %cst_12 : f32 to vector<3x128xf32>
    %84 = arith.maximumf %82, %83 : vector<3x128xf32>
    %85 = arith.truncf %84 : vector<3x128xf32> to vector<3x128xbf16>
    %c0_13 = arith.constant 0 : index
    %c0_14 = arith.constant 0 : index
    %86 = vector.load %arg2[%c0_13, %c0_14] : memref<264x128xbf16, #tpu.memory_space<vmem>>, vector<128x128xbf16>
    %c128 = arith.constant 128 : index
    %c0_15 = arith.constant 0 : index
    %87 = vector.load %arg2[%c128, %c0_15] : memref<264x128xbf16, #tpu.memory_space<vmem>>, vector<64x32xbf16>
    %c192 = arith.constant 192 : index
    %c0_16 = arith.constant 0 : index
    %88 = vector.load %arg2[%c192, %c0_16] : memref<264x128xbf16, #tpu.memory_space<vmem>>, vector<32x128xbf16>
    %c2 = arith.constant 2 : index
    %c0_17 = arith.constant 0 : index
    %89 = vector.load %arg3[%c2, %c0_17] : memref<48x128xf32, #tpu.memory_space<vmem>>, vector<1x128xf32>
    %c4 = arith.constant 4 : index
    %c0_18 = arith.constant 0 : index
    %90 = vector.load %arg3[%c4, %c0_18] : memref<48x128xf32, #tpu.memory_space<vmem>>, vector<1x32xf32>
    %c3 = arith.constant 3 : index
    %c0_19 = arith.constant 0 : index
    %91 = vector.load %arg3[%c3, %c0_19] : memref<48x128xf32, #tpu.memory_space<vmem>>, vector<1x128xf32>
    %92 = vector.extract_strided_slice %85 {offsets = [0, 0], sizes = [1, 64], strides = [1, 1]} : vector<3x128xbf16> to vector<1x64xbf16>
    %93 = vector.extract_strided_slice %85 {offsets = [1, 0], sizes = [1, 64], strides = [1, 1]} : vector<3x128xbf16> to vector<1x64xbf16>
    %94 = vector.extract_strided_slice %85 {offsets = [2, 0], sizes = [1, 64], strides = [1, 1]} : vector<3x128xbf16> to vector<1x64xbf16>
    %95 = vector.extract_strided_slice %86 {offsets = [0, 0], sizes = [64, 128], strides = [1, 1]} : vector<128x128xbf16> to vector<64x128xbf16>
    %cst_20 = arith.constant dense<0.000000e+00> : vector<1x128xf32>
    %96 = tpu.matmul %92, %95, %cst_20 {dimension_numbers = #tpu.dot_dimension_numbers<[1], [0], [0], [1], [0, 0, 1, 1], [], []>} : vector<1x64xbf16>, vector<64x128xbf16>, vector<1x128xf32> -> vector<1x128xf32>
    %97 = vector.extract_strided_slice %86 {offsets = [64, 0], sizes = [64, 128], strides = [1, 1]} : vector<128x128xbf16> to vector<64x128xbf16>
    %cst_21 = arith.constant dense<0.000000e+00> : vector<1x128xf32>
    %98 = tpu.matmul %93, %97, %cst_21 {dimension_numbers = #tpu.dot_dimension_numbers<[1], [0], [0], [1], [0, 0, 1, 1], [], []>} : vector<1x64xbf16>, vector<64x128xbf16>, vector<1x128xf32> -> vector<1x128xf32>
    %99 = arith.addf %96, %98 : vector<1x128xf32>
    %100 = arith.addf %99, %89 : vector<1x128xf32>
    %cst_22 = arith.constant dense<0.000000e+00> : vector<1x32xf32>
    %101 = tpu.matmul %94, %87, %cst_22 {dimension_numbers = #tpu.dot_dimension_numbers<[1], [0], [0], [1], [0, 0, 1, 1], [], []>} : vector<1x64xbf16>, vector<64x32xbf16>, vector<1x32xf32> -> vector<1x32xf32>
    %102 = arith.addf %101, %90 : vector<1x32xf32>
    %cst_23 = arith.constant 0.000000e+00 : f32
    %103 = vector.broadcast %cst_23 : f32 to vector<1x32xf32>
    %104 = arith.maximumf %102, %103 : vector<1x32xf32>
    %105 = arith.truncf %104 : vector<1x32xf32> to vector<1x32xbf16>
    %cst_24 = arith.constant dense<0.000000e+00> : vector<1x128xf32>
    %106 = tpu.matmul %105, %88, %cst_24 {dimension_numbers = #tpu.dot_dimension_numbers<[1], [0], [0], [1], [0, 0, 1, 1], [], []>} : vector<1x32xbf16>, vector<32x128xbf16>, vector<1x128xf32> -> vector<1x128xf32>
    %107 = arith.addf %106, %91 : vector<1x128xf32>
    %108 = math.tanh %107 : vector<1x128xf32>
    %109 = arith.addf %100, %108 : vector<1x128xf32>
    %c0_25 = arith.constant 0 : index
    %c0_26 = arith.constant 0 : index
    %c0_27 = arith.constant 0 : index
    %110 = vector.load %arg4[%c0_25, %c0_26, %c0_27] : memref<2x1x128xf32, #tpu.memory_space<vmem>>, vector<1x1x128xf32>
    %111 = vector.shape_cast %110 : vector<1x1x128xf32> to vector<1x128xf32>
    %112 = vector.shape_cast %109 : vector<1x128xf32> to vector<1x1x128xf32>
    tpu.vector_store %arg4[%c0_25, %c0_26, %c0_27], %112 {strides = array<i32>} : memref<2x1x128xf32, #tpu.memory_space<vmem>>, vector<1x1x128xf32>,
    %113 = vector.extract_strided_slice %85 {offsets = [0, 64], sizes = [1, 64], strides = [1, 1]} : vector<3x128xbf16> to vector<1x64xbf16>
    %114 = vector.extract_strided_slice %85 {offsets = [1, 64], sizes = [1, 64], strides = [1, 1]} : vector<3x128xbf16> to vector<1x64xbf16>
    %115 = vector.extract_strided_slice %85 {offsets = [2, 64], sizes = [1, 64], strides = [1, 1]} : vector<3x128xbf16> to vector<1x64xbf16>
    %116 = vector.extract_strided_slice %86 {offsets = [0, 0], sizes = [64, 128], strides = [1, 1]} : vector<128x128xbf16> to vector<64x128xbf16>
    %cst_28 = arith.constant dense<0.000000e+00> : vector<1x128xf32>
    %117 = tpu.matmul %113, %116, %cst_28 {dimension_numbers = #tpu.dot_dimension_numbers<[1], [0], [0], [1], [0, 0, 1, 1], [], []>} : vector<1x64xbf16>, vector<64x128xbf16>, vector<1x128xf32> -> vector<1x128xf32>
    %118 = vector.extract_strided_slice %86 {offsets = [64, 0], sizes = [64, 128], strides = [1, 1]} : vector<128x128xbf16> to vector<64x128xbf16>
    %cst_29 = arith.constant dense<0.000000e+00> : vector<1x128xf32>
    %119 = tpu.matmul %114, %118, %cst_29 {dimension_numbers = #tpu.dot_dimension_numbers<[1], [0], [0], [1], [0, 0, 1, 1], [], []>} : vector<1x64xbf16>, vector<64x128xbf16>, vector<1x128xf32> -> vector<1x128xf32>
    %120 = arith.addf %117, %119 : vector<1x128xf32>
    %121 = arith.addf %120, %89 : vector<1x128xf32>
    %cst_30 = arith.constant dense<0.000000e+00> : vector<1x32xf32>
    %122 = tpu.matmul %115, %87, %cst_30 {dimension_numbers = #tpu.dot_dimension_numbers<[1], [0], [0], [1], [0, 0, 1, 1], [], []>} : vector<1x64xbf16>, vector<64x32xbf16>, vector<1x32xf32> -> vector<1x32xf32>
    %123 = arith.addf %122, %90 : vector<1x32xf32>
    %cst_31 = arith.constant 0.000000e+00 : f32
    %124 = vector.broadcast %cst_31 : f32 to vector<1x32xf32>
    %125 = arith.maximumf %123, %124 : vector<1x32xf32>
    %126 = arith.truncf %125 : vector<1x32xf32> to vector<1x32xbf16>
    %cst_32 = arith.constant dense<0.000000e+00> : vector<1x128xf32>
    %127 = tpu.matmul %126, %88, %cst_32 {dimension_numbers = #tpu.dot_dimension_numbers<[1], [0], [0], [1], [0, 0, 1, 1], [], []>} : vector<1x32xbf16>, vector<32x128xbf16>, vector<1x128xf32> -> vector<1x128xf32>
    %128 = arith.addf %127, %91 : vector<1x128xf32>
    %129 = math.tanh %128 : vector<1x128xf32>
    %130 = arith.addf %121, %129 : vector<1x128xf32>
    %c1_33 = arith.constant 1 : index
    %c0_34 = arith.constant 0 : index
    %c0_35 = arith.constant 0 : index
    %131 = vector.load %arg4[%c1_33, %c0_34, %c0_35] : memref<2x1x128xf32, #tpu.memory_space<vmem>>, vector<1x1x128xf32>
    %132 = vector.shape_cast %131 : vector<1x1x128xf32> to vector<1x128xf32>
    %133 = vector.shape_cast %130 : vector<1x128xf32> to vector<1x1x128xf32>
    tpu.vector_store %arg4[%c1_33, %c0_34, %c0_35], %133 {strides = array<i32>} : memref<2x1x128xf32, #tpu.memory_space<vmem>>, vector<1x1x128xf32>,
    return
  }
  func.func @transform_0(%arg0: i32) -> (i32, i32, i32) {
    %c0_i32 = arith.constant 0 : i32
    %c0_i32_0 = arith.constant 0 : i32
    %c0_i32_1 = arith.constant 0 : i32
    return %arg0, %c0_i32, %c0_i32_0 : i32, i32, i32
  }
  func.func @transform_1(%arg0: i32) -> (i32, i32) {
    %c0_i32 = arith.constant 0 : i32
    %c0_i32_0 = arith.constant 0 : i32
    %c0_i32_1 = arith.constant 0 : i32
    return %c0_i32, %c0_i32_0 : i32, i32
  }
  func.func @transform_2(%arg0: i32) -> (i32, i32) {
    %c0_i32 = arith.constant 0 : i32
    %c0_i32_0 = arith.constant 0 : i32
    %c0_i32_1 = arith.constant 0 : i32
    return %c0_i32, %c0_i32_0 : i32, i32
  }
  func.func @transform_3(%arg0: i32) -> (i32, i32, i32) {
    %c0_i32 = arith.constant 0 : i32
    %c0_i32_0 = arith.constant 0 : i32
    %c0_i32_1 = arith.constant 0 : i32
    return %arg0, %c0_i32, %c0_i32_0 : i32, i32, i32
  }
}

</mosaic_0001>

<llo_original>
// kernel: _fused_forward.1
$region0: #{_fused_forward.1}
  #allocation0 [shape = 'u32[]', space=smem, size = 0x4, offset = 0x4, fixed_abs, tag = 'smem constant byte address 0x4 - core index']
  #allocation1 [shape = 'u32[144,128]{1,0:T(1,128)}', space=vmem, size = 0x12000, scoped, tag = 'internal scratch']
  %s0 = inlined_call_operand.vmem [shape: f32[2,4,82], index: 0, kind: input, shape index: {}]
  %s1 = inlined_call_operand.hbm [shape: bf16[264,128], index: 1, kind: input, shape index: {}]
  %s2 = inlined_call_operand.vmem [shape: f32[48,128], index: 2, kind: input, shape index: {}]
  %s3 = inlined_call_operand.vmem [shape: f32[2,1,128], index: 3, kind: output, shape index: {}]
  %s4 = sld [smem:[#allocation0]]
  $region26: #{_fused_forward.1} parent=0
    _
  %s6 = ssub.s32 1, %s4
  %s7 = scalar_select 0, %s6, %s4
  $region1: #{_fused_forward.1} parent=0
    #allocation2 [shape = 'u8[67584]{0}', space=vmem, size = 0x10800, scoped, tag = 'input window, operand 1, single buffered']
    #allocation3 [shape = 's32[1]{0}', space=sflag, size = 0x4, scoped, tag = 'scoped memory for _fused_forward.1']
    %8 = vsyncpa [#allocation3], 0
    // Predicated region
    $region2: #{_fused_forward.1} parent=1 // pred_check
      _
    $region3: #{_fused_forward.1} parent=1 // pred_check_branch
      %10 = sbr.rel (0) target = $region5
    $region4: #{_fused_forward.1} parent=1 // pred_region
      _
    $region5: #{_fused_forward.1} parent=1 // pred_fallthru
      _
    // Predicated region
    $region6: #{_fused_forward.1} parent=1 // pred_check
      _
    $region7: #{_fused_forward.1} parent=1 // pred_check_branch
      %12 = sbr.rel (0) target = $region9
    $region8: #{_fused_forward.1} parent=1 // pred_region
      %s14 = ssub.s32 2112, 2112
      %15 = vsyncadd [#allocation3], %s14
      %s16 = sshll.u32 [#allocation2], 4
      %s17 = int_to_ptr.vmem [resolvable:$true] %s16
      %22 = dma.hbm_to_vmem [thread:$0]  %s1, 2112, %s17, [#allocation3], 64, 64, 4
    $region9: #{_fused_forward.1} parent=1 // pred_fallthru
      _
    // Predicated region
    $region10: #{_fused_forward.1} parent=1 // pred_check
      _
    $region11: #{_fused_forward.1} parent=1 // pred_check_branch
      %24 = sbr.rel (0) target = $region13
    $region12: #{_fused_forward.1} parent=1 // pred_region
      _
    $region13: #{_fused_forward.1} parent=1 // pred_fallthru
      _
    // Predicated region
    $region14: #{_fused_forward.1} parent=1 // pred_check
      _
    $region15: #{_fused_forward.1} parent=1 // pred_check_branch
      %26 = sbr.rel (0) target = $region17
    $region16: #{_fused_forward.1} parent=1 // pred_region
      %27 = dma.done [#allocation3], 2112
    $region17: #{_fused_forward.1} parent=1 // pred_fallthru
      _
    %v29 = vld [vmem:[%s2] sm:$0x3]
    %v30 = vld [vmem:[%s0] sm:$0xf]
    %s31 = scalar_lea.vmem %s0, 4
    %v32 = vld [vmem:[%s31] sm:$0xf]
    %v33 = vlaneseq
    %v34 = vshrl.u32 %v33, 7
    %v35 = vsub.s32 0, %v34
    %v36 = vrot.slane %v29, %v35
    %v37 = vmul.f32 %v30, %v36
    %v38 = vmul.f32 %v32, %v36
    %40 = vrot.lane.b32.xlu0 %v38, 64
    %v41 = vpop.permute.xlu0 %40
    %vm43 = vcmask 523264
    %v44 = vsel %vm43, %v37, %v41
    %46 = vrot.lane.b32.xlu0 %v30, 127
    %v47 = vpop.permute.xlu0 %46
    %50 = vrot.lane.b32.xlu0 %v32, 63
    %v51 = vpop.permute.xlu0 %50
    %v53 = vsel %vm43, %v47, %v51
    %v54 = vlaneseq
    %v55 = vshrl.u32 %v54, 7
    %v56 = vsub.s32 1, %v55
    %v57 = vrot.slane %v29, %v56
    %59 = vrot.lane.b32.xlu0 %v57, 2
    %v60 = vpop.permute.xlu0 %59
    %v62 = vmul.f32 %v30, %v60
    %v63 = vmul.f32 %v32, %v60
    %65 = vrot.lane.b32.xlu0 %v62, 126
    %v66 = vpop.permute.xlu0 %65
    %69 = vrot.lane.b32.xlu0 %v63, 62
    %v70 = vpop.permute.xlu0 %69
    %v72 = vsel %vm43, %v66, %v70
    %74 = vrot.lane.b32.xlu0 %v36, 8
    %v75 = vpop.permute.xlu0 %74
    %v77 = vmul.f32 %v30, %v75
    %v78 = vmul.f32 %v32, %v75
    %80 = vrot.lane.b32.xlu0 %v77, 120
    %v81 = vpop.permute.xlu0 %80
    %84 = vrot.lane.b32.xlu0 %v78, 56
    %v85 = vpop.permute.xlu0 %84
    %v87 = vsel %vm43, %v81, %v85
    %88 = vrot.lane.b32.xlu0 %v30, 119
    %v89 = vpop.permute.xlu0 %88
    %91 = vrot.lane.b32.xlu0 %v32, 55
    %v92 = vpop.permute.xlu0 %91
    %v94 = vsel %vm43, %v89, %v92
    %95 = vrot.lane.b32.xlu0 %v57, 10
    %v96 = vpop.permute.xlu0 %95
    %v98 = vmul.f32 %v30, %v96
    %v99 = vmul.f32 %v32, %v96
    %101 = vrot.lane.b32.xlu0 %v98, 118
    %v102 = vpop.permute.xlu0 %101
    %105 = vrot.lane.b32.xlu0 %v99, 54
    %v106 = vpop.permute.xlu0 %105
    %v108 = vsel %vm43, %v102, %v106
    %109 = vrot.lane.b32.xlu0 %v36, 16
    %v110 = vpop.permute.xlu0 %109
    %v112 = vmul.f32 %v30, %v110
    %v113 = vmul.f32 %v32, %v110
    %115 = vrot.lane.b32.xlu0 %v112, 112
    %v116 = vpop.permute.xlu0 %115
    %119 = vrot.lane.b32.xlu0 %v113, 48
    %v120 = vpop.permute.xlu0 %119
    %v122 = vsel %vm43, %v116, %v120
    %123 = vrot.lane.b32.xlu0 %v30, 111
    %v124 = vpop.permute.xlu0 %123
    %126 = vrot.lane.b32.xlu0 %v32, 47
    %v127 = vpop.permute.xlu0 %126
    %v129 = vsel %vm43, %v124, %v127
    %130 = vrot.lane.b32.xlu0 %v57, 18
    %v131 = vpop.permute.xlu0 %130
    %v133 = vmul.f32 %v30, %v131
    %v134 = vmul.f32 %v32, %v131
    %136 = vrot.lane.b32.xlu0 %v133, 110
    %v137 = vpop.permute.xlu0 %136
    %140 = vrot.lane.b32.xlu0 %v134, 46
    %v141 = vpop.permute.xlu0 %140
    %v143 = vsel %vm43, %v137, %v141
    %v145 = vrot.slane %v53, 4
    %v148 = vrot.slane %v87, 4
    %v151 = vrot.slane %v108, 4
    %v154 = vrot.slane %v129, 4
    %vm156 = vcmask 1043456
    %v157 = vsel %vm156, %v44, %v145
    %v158 = vsel %vm156, %v72, %v148
    %v159 = vsel %vm156, %v94, %v151
    %v160 = vsel %vm156, %v122, %v154
    %v161 = vpack.c.bf16 %v158, %v157
    %v162 = vpack.c.bf16 %v160, %v159
    %v163 = vpack.c.bf16 %v143, %v143
    %v164 = vld [vmem:[#allocation2 + $0x70] sm:$0xf]
    %v165 = vld [vmem:[#allocation2 + $0x74] sm:$0xf]
    %v166 = vld [vmem:[#allocation2 + $0x78] sm:$0xf]
    %v167 = vld [vmem:[#allocation2 + $0x7c] sm:$0xf]
    %v168 = vld [vmem:[%s2 + $0x8] sm:$0xff]
    %v169 = vld [vmem:[%s2 + $0x10] sm:$0xff]
    %v170 = vld [vmem:[%s2 + $0x18] sm:$0xff]
    %v171 = vld [vmem:[%s2 + $0x20] sm:$0xff]
    %173 = vset.pattern.permute.xlu0 0
    %174 = vperm.xlu0 %173, %v168
    %v175 = vpop.permute.xlu0 %174
    %178 = vset.pattern.permute.xlu0 0
    %179 = vperm.xlu0 %178, %v169
    %v180 = vpop.permute.xlu0 %179
    %183 = vset.pattern.permute.xlu0 0
    %184 = vperm.xlu0 %183, %v170
    %v185 = vpop.permute.xlu0 %184
    %188 = vset.pattern.permute.xlu0 0
    %189 = vperm.xlu0 %188, %v171
    %v190 = vpop.permute.xlu0 %189
    %v196 = vunpack.c.l.b16 %v164
    %v197 = vunpack.c.l.b16 %v165
    %v198 = vunpack.c.l.b16 %v166
    %v199 = vunpack.c.l.b16 %v167
    %v200 = vpack.c.b16 %v197, %v196
    %v201 = vpack.c.b16 %v199, %v198
    %vm202 = vcmask 293888
    %v204 = vsel %vm202, %v200, 0
    %v207 = vsel %vm202, %v201, 0
    %vm209 = vcmask 1041408
    %v211 = vsel %vm209, %v163, 0
    %213 = vmatprep.subr.bf16.mxu0 0
    %214 = vmatpush1.bf16.msra.mxu0 0
    %215 = vmatprep.subr.bf16.mxu0 0
    %216 = vmatpush1.bf16.msra.mxu0 0
    %217 = vmatprep.subr.bf16.mxu0 0
    %218 = vmatpush1.bf16.msra.mxu0 0
    %219 = vmatprep.subr.bf16.mxu0 0
    %220 = vmatpush1.bf16.msra.mxu0 0
    %221 = vmatprep.subr.bf16.mxu0 0
    %222 = vmatpush1.bf16.msra.mxu0 0
    %223 = vmatprep.subr.bf16.mxu0 0
    %224 = vmatpush1.bf16.msra.mxu0 %v211
    %225 = vmatprep.subr.bf16.mxu0 0
    %226 = vmatpush1.bf16.msra.mxu0 %v162
    %227 = vmatprep.subr.bf16.mxu0 0
    %228 = vmatpush1.bf16.msra.mxu0 %v161
    %229 = vmatprep.subr.bf16.mxu0 0
    %230 = vmatpush2.bf16.msra.mxu0 0
    %231 = vmatprep.subr.bf16.mxu0 0
    %232 = vmatpush2.bf16.msra.mxu0 0
    %233 = vmatprep.subr.bf16.mxu0 0
    %234 = vmatpush2.bf16.msra.mxu0 0
    %235 = vmatprep.subr.bf16.mxu0 0
    %236 = vmatpush2.bf16.msra.mxu0 0
    %237 = vmatprep.subr.bf16.mxu0 0
    %238 = vmatpush2.bf16.msra.mxu0 0
    %239 = vmatprep.subr.bf16.mxu0 0
    %240 = vmatpush2.bf16.msra.mxu0 0
    %241 = vmatprep.subr.bf16.mxu0 0
    %242 = vmatpush2.bf16.msra.mxu0 0
    %243 = vmatprep.subr.bf16.mxu0 0
    %244 = vmatpush2.bf16.msra.mxu0 0
    %245 = vmatprep.mubr.bf16.mxu0 0
    %246 = vmatmul.mubr.bf16.gmra.mxu0 %v204
    %v247 = vpop.f32.mrf.mxu0
    %v248 = vadd.f32 %v175, %v247
    %v249 = vpop.f32.mrf.mxu0
    %v250 = vpop.f32.mrf.mxu0
    %v251 = vadd.f32 %v180, %v250
    %v252 = vpop.f32.mrf.mxu0
    %253 = vmatprep.mubr.bf16.mxu0 0
    %254 = vmatmul.mubr.bf16.gmra.mxu0 %v207
    %v255 = vpop.f32.mrf.mxu0
    %v256 = vadd.f32 %v185, %v255
    %v257 = vpop.f32.mrf.mxu0
    %v258 = vpop.f32.mrf.mxu0
    %v259 = vadd.f32 %v190, %v258
    %v260 = vpop.f32.mrf.mxu0
    %261 = vdwg.mxu0
    %v262 = vmax.f32 %v248, 0.0
    %v263 = vmax.f32 %v251, 0.0
    %v264 = vmax.f32 %v256, 0.0
    %v265 = vmax.f32 %v259, 0.0
    %v266 = vld [vmem:[#allocation2 + $0x80] sm:$0x3]
    %v267 = vld [vmem:[%s2 + $0x28] sm:$0x7]
    %v268 = vpack.c.bf16 %v263, %v262
    %v269 = vpack.c.bf16 %v265, %v264
    %271 = vset.pattern.permute.xlu0 0
    %272 = vperm.xlu0 %271, %v267
    %v273 = vpop.permute.xlu0 %272
    %vm275 = vcmask 261120
    %v277 = vsel %vm275, %v266, 0
    %279 = vmatprep.subr.bf16.mxu0 0
    %280 = vmatpush1.bf16.msra.mxu0 0
    %281 = vmatprep.subr.bf16.mxu0 0
    %282 = vmatpush1.bf16.msra.mxu0 0
    %283 = vmatprep.subr.bf16.mxu0 0
    %284 = vmatpush1.bf16.msra.mxu0 0
    %285 = vmatprep.subr.bf16.mxu0 0
    %286 = vmatpush1.bf16.msra.mxu0 0
    %287 = vmatprep.subr.bf16.mxu0 0
    %288 = vmatpush1.bf16.msra.mxu0 0
    %289 = vmatprep.subr.bf16.mxu0 0
    %290 = vmatpush1.bf16.msra.mxu0 0
    %291 = vmatprep.subr.bf16.mxu0 0
    %292 = vmatpush1.bf16.msra.mxu0 %v269
    %293 = vmatprep.subr.bf16.mxu0 0
    %294 = vmatpush1.bf16.msra.mxu0 %v268
    %295 = vmatprep.subr.bf16.mxu0 0
    %296 = vmatpush2.bf16.msra.mxu0 0
    %297 = vmatprep.subr.bf16.mxu0 0
    %298 = vmatpush2.bf16.msra.mxu0 0
    %299 = vmatprep.subr.bf16.mxu0 0
    %300 = vmatpush2.bf16.msra.mxu0 0
    %301 = vmatprep.subr.bf16.mxu0 0
    %302 = vmatpush2.bf16.msra.mxu0 0
    %303 = vmatprep.subr.bf16.mxu0 0
    %304 = vmatpush2.bf16.msra.mxu0 0
    %305 = vmatprep.subr.bf16.mxu0 0
    %306 = vmatpush2.bf16.msra.mxu0 0
    %307 = vmatprep.subr.bf16.mxu0 0
    %308 = vmatpush2.bf16.msra.mxu0 0
    %309 = vmatprep.subr.bf16.mxu0 0
    %310 = vmatpush2.bf16.msra.mxu0 0
    %311 = vmatprep.mubr.bf16.mxu0 0
    %312 = vmatmul.mubr.bf16.gmra.mxu0 %v277
    %v313 = vpop.f32.mrf.mxu0
    %v314 = vadd.f32 %v273, %v313
    %v315 = vpop.f32.mrf.mxu0
    %v316 = vpop.f32.mrf.mxu0
    %v317 = vpop.f32.mrf.mxu0
    %318 = vdwg.mxu0
    %v319 = vmax.f32 %v314, 0.0
    %v320 = vpack.c.bf16 %v319, %v319
    %v321 = vld [vmem:[#allocation2] sm:$0xf]
    %v322 = vld [vmem:[#allocation2 + $0x4] sm:$0xf]
    %v323 = vld [vmem:[#allocation2 + $0x8] sm:$0xf]
    %v324 = vld [vmem:[#allocation2 + $0xc] sm:$0xf]
    %v325 = vld [vmem:[#allocation2 + $0x10] sm:$0xf]
    %v326 = vld [vmem:[#allocation2 + $0x14] sm:$0xf]
    %v327 = vld [vmem:[#allocation2 + $0x18] sm:$0xf]
    %v328 = vld [vmem:[#allocation2 + $0x1c] sm:$0xf]
    %v329 = vld [vmem:[#allocation2 + $0x20] sm:$0xf]
    %v330 = vld [vmem:[#allocation2 + $0x24] sm:$0xf]
    %v331 = vld [vmem:[#allocation2 + $0x28] sm:$0xf]
    %v332 = vld [vmem:[#allocation2 + $0x2c] sm:$0xf]
    %v333 = vld [vmem:[#allocation2 + $0x30] sm:$0xf]
    %v334 = vld [vmem:[#allocation2 + $0x34] sm:$0xf]
    %v335 = vld [vmem:[#allocation2 + $0x38] sm:$0xf]
    %v336 = vld [vmem:[#allocation2 + $0x3c] sm:$0xf]
    %v337 = vld [vmem:[#allocation2 + $0x40] sm:$0xf]
    %v338 = vld [vmem:[#allocation2 + $0x44] sm:$0xf]
    %v339 = vld [vmem:[#allocation2 + $0x48] sm:$0xf]
    %v340 = vld [vmem:[#allocation2 + $0x4c] sm:$0xf]
    %v341 = vld [vmem:[#allocation2 + $0x50] sm:$0xf]
    %v342 = vld [vmem:[#allocation2 + $0x54] sm:$0xf]
    %v343 = vld [vmem:[#allocation2 + $0x58] sm:$0xf]
    %v344 = vld [vmem:[#allocation2 + $0x5c] sm:$0xf]
    %v345 = vld [vmem:[#allocation2 + $0x60] sm:$0xf]
    %v346 = vld [vmem:[#allocation2 + $0x64] sm:$0xf]
    %v347 = vld [vmem:[#allocation2 + $0x68] sm:$0xf]
    %v348 = vld [vmem:[#allocation2 + $0x6c] sm:$0xf]
    %v349 = vld [vmem:[%s2 + $0x2] sm:$0x1]
    %v350 = vld [vmem:[%s2 + $0x4] sm:$0x1]
    %v351 = vld [vmem:[%s2 + $0x3] sm:$0x1]
    %v353 = vshrl.u32 %v320, 16
    %v363 = vunpack.c.l.b16 %v329
    %v364 = vunpack.c.l.b16 %v330
    %v365 = vunpack.c.l.b16 %v331
    %v366 = vunpack.c.l.b16 %v332
    %v367 = vunpack.c.l.b16 %v333
    %v368 = vunpack.c.l.b16 %v334
    %v369 = vunpack.c.l.b16 %v335
    %v370 = vunpack.c.l.b16 %v336
    %v371 = vpack.c.b16 %v364, %v363
    %v372 = vpack.c.b16 %v366, %v365
    %v373 = vpack.c.b16 %v368, %v367
    %v374 = vpack.c.b16 %v370, %v369
    %v380 = vsel %vm43, %v353, 0
    %382 = vmatprep.subr.bf16.mxu0 0
    %383 = vmatpush1.bf16.msra.mxu0 0
    %384 = vmatprep.subr.bf16.mxu0 0
    %385 = vmatpush1.bf16.msra.mxu0 0
    %386 = vmatprep.subr.bf16.mxu0 0
    %387 = vmatpush1.bf16.msra.mxu0 0
    %388 = vmatprep.subr.bf16.mxu0 0
    %389 = vmatpush1.bf16.msra.mxu0 0
    %390 = vmatprep.subr.bf16.mxu0 0
    %391 = vmatpush1.bf16.msra.mxu0 %v374
    %392 = vmatprep.subr.bf16.mxu0 0
    %393 = vmatpush1.bf16.msra.mxu0 %v373
    %394 = vmatprep.subr.bf16.mxu0 0
    %395 = vmatpush1.bf16.msra.mxu0 %v372
    %396 = vmatprep.subr.bf16.mxu0 0
    %397 = vmatpush1.bf16.msra.mxu0 %v371
    %398 = vmatprep.subr.bf16.mxu0 0
    %399 = vmatpush2.bf16.msra.mxu0 0
    %400 = vmatprep.subr.bf16.mxu0 0
    %401 = vmatpush2.bf16.msra.mxu0 0
    %402 = vmatprep.subr.bf16.mxu0 0
    %403 = vmatpush2.bf16.msra.mxu0 0
    %404 = vmatprep.subr.bf16.mxu0 0
    %405 = vmatpush2.bf16.msra.mxu0 0
    %406 = vmatprep.subr.bf16.mxu0 0
    %407 = vmatpush2.bf16.msra.mxu0 0
    %408 = vmatprep.subr.bf16.mxu0 0
    %409 = vmatpush2.bf16.msra.mxu0 0
    %410 = vmatprep.subr.bf16.mxu0 0
    %411 = vmatpush2.bf16.msra.mxu0 0
    %412 = vmatprep.subr.bf16.mxu0 0
    %413 = vmatpush2.bf16.msra.mxu0 0
    %414 = vmatprep.mubr.bf16.mxu0 0
    %415 = vmatmul.mubr.bf16.gmra.mxu0 %v380
    %v416 = vpop.f32.mrf.mxu0
    %v417 = vadd.f32 0.0, %v416
    %v418 = vpop.f32.mrf.mxu0
    %v419 = vpop.f32.mrf.mxu0
    %v420 = vpop.f32.mrf.mxu0
    %421 = vdwg.mxu0
    %v430 = vunpack.c.l.b16 %v321
    %v431 = vunpack.c.l.b16 %v322
    %v432 = vunpack.c.l.b16 %v323
    %v433 = vunpack.c.l.b16 %v324
    %v434 = vunpack.c.l.b16 %v325
    %v435 = vunpack.c.l.b16 %v326
    %v436 = vunpack.c.l.b16 %v327
    %v437 = vunpack.c.l.b16 %v328
    %v438 = vpack.c.b16 %v431, %v430
    %v439 = vpack.c.b16 %v433, %v432
    %v440 = vpack.c.b16 %v435, %v434
    %v441 = vpack.c.b16 %v437, %v436
    %v446 = vsel %vm43, %v320, 0
    %448 = vmatprep.subr.bf16.mxu0 0
    %449 = vmatpush1.bf16.msra.mxu0 0
    %450 = vmatprep.subr.bf16.mxu0 0
    %451 = vmatpush1.bf16.msra.mxu0 0
    %452 = vmatprep.subr.bf16.mxu0 0
    %453 = vmatpush1.bf16.msra.mxu0 0
    %454 = vmatprep.subr.bf16.mxu0 0
    %455 = vmatpush1.bf16.msra.mxu0 0
    %456 = vmatprep.subr.bf16.mxu0 0
    %457 = vmatpush1.bf16.msra.mxu0 %v441
    %458 = vmatprep.subr.bf16.mxu0 0
    %459 = vmatpush1.bf16.msra.mxu0 %v440
    %460 = vmatprep.subr.bf16.mxu0 0
    %461 = vmatpush1.bf16.msra.mxu0 %v439
    %462 = vmatprep.subr.bf16.mxu0 0
    %463 = vmatpush1.bf16.msra.mxu0 %v438
    %464 = vmatprep.subr.bf16.mxu0 0
    %465 = vmatpush2.bf16.msra.mxu0 0
    %466 = vmatprep.subr.bf16.mxu0 0
    %467 = vmatpush2.bf16.msra.mxu0 0
    %468 = vmatprep.subr.bf16.mxu0 0
    %469 = vmatpush2.bf16.msra.mxu0 0
    %470 = vmatprep.subr.bf16.mxu0 0
    %471 = vmatpush2.bf16.msra.mxu0 0
    %472 = vmatprep.subr.bf16.mxu0 0
    %473 = vmatpush2.bf16.msra.mxu0 0
    %474 = vmatprep.subr.bf16.mxu0 0
    %475 = vmatpush2.bf16.msra.mxu0 0
    %476 = vmatprep.subr.bf16.mxu0 0
    %477 = vmatpush2.bf16.msra.mxu0 0
    %478 = vmatprep.subr.bf16.mxu0 0
    %479 = vmatpush2.bf16.msra.mxu0 0
    %480 = vmatprep.mubr.bf16.mxu0 0
    %481 = vmatmul.mubr.bf16.gmra.mxu0 %v446
    %v482 = vpop.f32.mrf.mxu0
    %v483 = vadd.f32 %v417, %v482
    %v484 = vpop.f32.mrf.mxu0
    %v485 = vpop.f32.mrf.mxu0
    %v486 = vpop.f32.mrf.mxu0
    %487 = vdwg.mxu0
    %v488 = vadd.f32 %v483, %v349
    %v490 = vrot.slane %v320, 1
    %v499 = vunpack.c.l.b16 %v337
    %v500 = vunpack.c.l.b16 %v338
    %v501 = vunpack.c.l.b16 %v339
    %v502 = vunpack.c.l.b16 %v340
    %v503 = vunpack.c.l.b16 %v341
    %v504 = vunpack.c.l.b16 %v342
    %v505 = vunpack.c.l.b16 %v343
    %v506 = vunpack.c.l.b16 %v344
    %v507 = vpack.c.b16 %v500, %v499
    %v508 = vpack.c.b16 %v502, %v501
    %v509 = vpack.c.b16 %v504, %v503
    %v510 = vpack.c.b16 %v506, %v505
    %v516 = vsel %vm43, %v490, 0
    %518 = vmatprep.subr.bf16.mxu0 0
    %519 = vmatpush1.bf16.msra.mxu0 0
    %520 = vmatprep.subr.bf16.mxu0 0
    %521 = vmatpush1.bf16.msra.mxu0 0
    %522 = vmatprep.subr.bf16.mxu0 0
    %523 = vmatpush1.bf16.msra.mxu0 0
    %524 = vmatprep.subr.bf16.mxu0 0
    %525 = vmatpush1.bf16.msra.mxu0 0
    %526 = vmatprep.subr.bf16.mxu0 0
    %527 = vmatpush1.bf16.msra.mxu0 %v510
    %528 = vmatprep.subr.bf16.mxu0 0
    %529 = vmatpush1.bf16.msra.mxu0 %v509
    %530 = vmatprep.subr.bf16.mxu0 0
    %531 = vmatpush1.bf16.msra.mxu0 %v508
    %532 = vmatprep.subr.bf16.mxu0 0
    %533 = vmatpush1.bf16.msra.mxu0 %v507
    %534 = vmatprep.subr.bf16.mxu0 0
    %535 = vmatpush2.bf16.msra.mxu0 0
    %536 = vmatprep.subr.bf16.mxu0 0
    %537 = vmatpush2.bf16.msra.mxu0 0
    %538 = vmatprep.subr.bf16.mxu0 0
    %539 = vmatpush2.bf16.msra.mxu0 0
    %540 = vmatprep.subr.bf16.mxu0 0
    %541 = vmatpush2.bf16.msra.mxu0 0
    %542 = vmatprep.subr.bf16.mxu0 0
    %543 = vmatpush2.bf16.msra.mxu0 0
    %544 = vmatprep.subr.bf16.mxu0 0
    %545 = vmatpush2.bf16.msra.mxu0 0
    %546 = vmatprep.subr.bf16.mxu0 0
    %547 = vmatpush2.bf16.msra.mxu0 0
    %548 = vmatprep.subr.bf16.mxu0 0
    %549 = vmatpush2.bf16.msra.mxu0 0
    %550 = vmatprep.mubr.bf16.mxu0 0
    %551 = vmatmul.mubr.bf16.gmra.mxu0 %v516
    %v552 = vpop.f32.mrf.mxu0
    %v553 = vadd.f32 %v350, %v552
    %v554 = vpop.f32.mrf.mxu0
    %v555 = vpop.f32.mrf.mxu0
    %v556 = vpop.f32.mrf.mxu0
    %557 = vdwg.mxu0
    %v558 = vmax.f32 %v553, 0.0
    %v559 = vpack.c.bf16 %v558, %v558
    %v564 = vunpack.c.l.b16 %v345
    %v565 = vunpack.c.l.b16 %v346
    %v566 = vunpack.c.l.b16 %v347
    %v567 = vunpack.c.l.b16 %v348
    %v568 = vpack.c.b16 %v565, %v564
    %v569 = vpack.c.b16 %v567, %v566
    %v573 = vsel %vm275, %v559, 0
    %575 = vmatprep.subr.bf16.mxu0 0
    %576 = vmatpush1.bf16.msra.mxu0 0
    %577 = vmatprep.subr.bf16.mxu0 0
    %578 = vmatpush1.bf16.msra.mxu0 0
    %579 = vmatprep.subr.bf16.mxu0 0
    %580 = vmatpush1.bf16.msra.mxu0 0
    %581 = vmatprep.subr.bf16.mxu0 0
    %582 = vmatpush1.bf16.msra.mxu0 0
    %583 = vmatprep.subr.bf16.mxu0 0
    %584 = vmatpush1.bf16.msra.mxu0 0
    %585 = vmatprep.subr.bf16.mxu0 0
    %586 = vmatpush1.bf16.msra.mxu0 0
    %587 = vmatprep.subr.bf16.mxu0 0
    %588 = vmatpush1.bf16.msra.mxu0 %v569
    %589 = vmatprep.subr.bf16.mxu0 0
    %590 = vmatpush1.bf16.msra.mxu0 %v568
    %591 = vmatprep.subr.bf16.mxu0 0
    %592 = vmatpush2.bf16.msra.mxu0 0
    %593 = vmatprep.subr.bf16.mxu0 0
    %594 = vmatpush2.bf16.msra.mxu0 0
    %595 = vmatprep.subr.bf16.mxu0 0
    %596 = vmatpush2.bf16.msra.mxu0 0
    %597 = vmatprep.subr.bf16.mxu0 0
    %598 = vmatpush2.bf16.msra.mxu0 0
    %599 = vmatprep.subr.bf16.mxu0 0
    %600 = vmatpush2.bf16.msra.mxu0 0
    %601 = vmatprep.subr.bf16.mxu0 0
    %602 = vmatpush2.bf16.msra.mxu0 0
    %603 = vmatprep.subr.bf16.mxu0 0
    %604 = vmatpush2.bf16.msra.mxu0 0
    %605 = vmatprep.subr.bf16.mxu0 0
    %606 = vmatpush2.bf16.msra.mxu0 0
    %607 = vmatprep.mubr.bf16.mxu0 0
    %608 = vmatmul.mubr.bf16.gmra.mxu0 %v573
    %v609 = vpop.f32.mrf.mxu0
    %v610 = vadd.f32 %v351, %v609
    %v611 = vpop.f32.mrf.mxu0
    %v612 = vpop.f32.mrf.mxu0
    %v613 = vpop.f32.mrf.mxu0
    %614 = vdwg.mxu0
    %v615 = vtanh.pop %v610
    %v616 = vadd.f32 %v488, %v615
    %617 = vst [vmem:[%s3] sm:$0x1] %v616
    %618 = vrot.lane.b32.xlu0 %v353, 64
    %v619 = vpop.permute.xlu0 %618
    %v621 = vsel %vm43, %v619, 0
    %623 = vmatprep.subr.bf16.mxu0 0
    %624 = vmatpush1.bf16.msra.mxu0 0
    %625 = vmatprep.subr.bf16.mxu0 0
    %626 = vmatpush1.bf16.msra.mxu0 0
    %627 = vmatprep.subr.bf16.mxu0 0
    %628 = vmatpush1.bf16.msra.mxu0 0
    %629 = vmatprep.subr.bf16.mxu0 0
    %630 = vmatpush1.bf16.msra.mxu0 0
    %631 = vmatprep.subr.bf16.mxu0 0
    %632 = vmatpush1.bf16.msra.mxu0 %v374
    %633 = vmatprep.subr.bf16.mxu0 0
    %634 = vmatpush1.bf16.msra.mxu0 %v373
    %635 = vmatprep.subr.bf16.mxu0 0
    %636 = vmatpush1.bf16.msra.mxu0 %v372
    %637 = vmatprep.subr.bf16.mxu0 0
    %638 = vmatpush1.bf16.msra.mxu0 %v371
    %639 = vmatprep.subr.bf16.mxu0 0
    %640 = vmatpush2.bf16.msra.mxu0 0
    %641 = vmatprep.subr.bf16.mxu0 0
    %642 = vmatpush2.bf16.msra.mxu0 0
    %643 = vmatprep.subr.bf16.mxu0 0
    %644 = vmatpush2.bf16.msra.mxu0 0
    %645 = vmatprep.subr.bf16.mxu0 0
    %646 = vmatpush2.bf16.msra.mxu0 0
    %647 = vmatprep.subr.bf16.mxu0 0
    %648 = vmatpush2.bf16.msra.mxu0 0
    %649 = vmatprep.subr.bf16.mxu0 0
    %650 = vmatpush2.bf16.msra.mxu0 0
    %651 = vmatprep.subr.bf16.mxu0 0
    %652 = vmatpush2.bf16.msra.mxu0 0
    %653 = vmatprep.subr.bf16.mxu0 0
    %654 = vmatpush2.bf16.msra.mxu0 0
    %655 = vmatprep.mubr.bf16.mxu0 0
    %656 = vmatmul.mubr.bf16.gmra.mxu0 %v621
    %v657 = vpop.f32.mrf.mxu0
    %v658 = vadd.f32 0.0, %v657
    %v659 = vpop.f32.mrf.mxu0
    %v660 = vpop.f32.mrf.mxu0
    %v661 = vpop.f32.mrf.mxu0
    %662 = vdwg.mxu0
    %663 = vrot.lane.b32.xlu0 %v320, 64
    %v664 = vpop.permute.xlu0 %663
    %v666 = vsel %vm43, %v664, 0
    %668 = vmatprep.subr.bf16.mxu0 0
    %669 = vmatpush1.bf16.msra.mxu0 0
    %670 = vmatprep.subr.bf16.mxu0 0
    %671 = vmatpush1.bf16.msra.mxu0 0
    %672 = vmatprep.subr.bf16.mxu0 0
    %673 = vmatpush1.bf16.msra.mxu0 0
    %674 = vmatprep.subr.bf16.mxu0 0
    %675 = vmatpush1.bf16.msra.mxu0 0
    %676 = vmatprep.subr.bf16.mxu0 0
    %677 = vmatpush1.bf16.msra.mxu0 %v441
    %678 = vmatprep.subr.bf16.mxu0 0
    %679 = vmatpush1.bf16.msra.mxu0 %v440
    %680 = vmatprep.subr.bf16.mxu0 0
    %681 = vmatpush1.bf16.msra.mxu0 %v439
    %682 = vmatprep.subr.bf16.mxu0 0
    %683 = vmatpush1.bf16.msra.mxu0 %v438
    %684 = vmatprep.subr.bf16.mxu0 0
    %685 = vmatpush2.bf16.msra.mxu0 0
    %686 = vmatprep.subr.bf16.mxu0 0
    %687 = vmatpush2.bf16.msra.mxu0 0
    %688 = vmatprep.subr.bf16.mxu0 0
    %689 = vmatpush2.bf16.msra.mxu0 0
    %690 = vmatprep.subr.bf16.mxu0 0
    %691 = vmatpush2.bf16.msra.mxu0 0
    %692 = vmatprep.subr.bf16.mxu0 0
    %693 = vmatpush2.bf16.msra.mxu0 0
    %694 = vmatprep.subr.bf16.mxu0 0
    %695 = vmatpush2.bf16.msra.mxu0 0
    %696 = vmatprep.subr.bf16.mxu0 0
    %697 = vmatpush2.bf16.msra.mxu0 0
    %698 = vmatprep.subr.bf16.mxu0 0
    %699 = vmatpush2.bf16.msra.mxu0 0
    %700 = vmatprep.mubr.bf16.mxu0 0
    %701 = vmatmul.mubr.bf16.gmra.mxu0 %v666
    %v702 = vpop.f32.mrf.mxu0
    %v703 = vadd.f32 %v658, %v702
    %v704 = vpop.f32.mrf.mxu0
    %v705 = vpop.f32.mrf.mxu0
    %v706 = vpop.f32.mrf.mxu0
    %707 = vdwg.mxu0
    %v708 = vadd.f32 %v703, %v349
    %709 = vrot.lane.b32.xlu0 %v490, 64
    %v710 = vpop.permute.xlu0 %709
    %v712 = vsel %vm43, %v710, 0
    %714 = vmatprep.subr.bf16.mxu0 0
    %715 = vmatpush1.bf16.msra.mxu0 0
    %716 = vmatprep.subr.bf16.mxu0 0
    %717 = vmatpush1.bf16.msra.mxu0 0
    %718 = vmatprep.subr.bf16.mxu0 0
    %719 = vmatpush1.bf16.msra.mxu0 0
    %720 = vmatprep.subr.bf16.mxu0 0
    %721 = vmatpush1.bf16.msra.mxu0 0
    %722 = vmatprep.subr.bf16.mxu0 0
    %723 = vmatpush1.bf16.msra.mxu0 %v510
    %724 = vmatprep.subr.bf16.mxu0 0
    %725 = vmatpush1.bf16.msra.mxu0 %v509
    %726 = vmatprep.subr.bf16.mxu0 0
    %727 = vmatpush1.bf16.msra.mxu0 %v508
    %728 = vmatprep.subr.bf16.mxu0 0
    %729 = vmatpush1.bf16.msra.mxu0 %v507
    %730 = vmatprep.subr.bf16.mxu0 0
    %731 = vmatpush2.bf16.msra.mxu0 0
    %732 = vmatprep.subr.bf16.mxu0 0
    %733 = vmatpush2.bf16.msra.mxu0 0
    %734 = vmatprep.subr.bf16.mxu0 0
    %735 = vmatpush2.bf16.msra.mxu0 0
    %736 = vmatprep.subr.bf16.mxu0 0
    %737 = vmatpush2.bf16.msra.mxu0 0
    %738 = vmatprep.subr.bf16.mxu0 0
    %739 = vmatpush2.bf16.msra.mxu0 0
    %740 = vmatprep.subr.bf16.mxu0 0
    %741 = vmatpush2.bf16.msra.mxu0 0
    %742 = vmatprep.subr.bf16.mxu0 0
    %743 = vmatpush2.bf16.msra.mxu0 0
    %744 = vmatprep.subr.bf16.mxu0 0
    %745 = vmatpush2.bf16.msra.mxu0 0
    %746 = vmatprep.mubr.bf16.mxu0 0
    %747 = vmatmul.mubr.bf16.gmra.mxu0 %v712
    %v748 = vpop.f32.mrf.mxu0
    %v749 = vadd.f32 %v350, %v748
    %v750 = vpop.f32.mrf.mxu0
    %v751 = vpop.f32.mrf.mxu0
    %v752 = vpop.f32.mrf.mxu0
    %753 = vdwg.mxu0
    %v754 = vmax.f32 %v749, 0.0
    %v755 = vpack.c.bf16 %v754, %v754
    %v757 = vsel %vm275, %v755, 0
    %759 = vmatprep.subr.bf16.mxu0 0
    %760 = vmatpush1.bf16.msra.mxu0 0
    %761 = vmatprep.subr.bf16.mxu0 0
    %762 = vmatpush1.bf16.msra.mxu0 0
    %763 = vmatprep.subr.bf16.mxu0 0
    %764 = vmatpush1.bf16.msra.mxu0 0
    %765 = vmatprep.subr.bf16.mxu0 0
    %766 = vmatpush1.bf16.msra.mxu0 0
    %767 = vmatprep.subr.bf16.mxu0 0
    %768 = vmatpush1.bf16.msra.mxu0 0
    %769 = vmatprep.subr.bf16.mxu0 0
    %770 = vmatpush1.bf16.msra.mxu0 0
    %771 = vmatprep.subr.bf16.mxu0 0
    %772 = vmatpush1.bf16.msra.mxu0 %v569
    %773 = vmatprep.subr.bf16.mxu0 0
    %774 = vmatpush1.bf16.msra.mxu0 %v568
    %775 = vmatprep.subr.bf16.mxu0 0
    %776 = vmatpush2.bf16.msra.mxu0 0
    %777 = vmatprep.subr.bf16.mxu0 0
    %778 = vmatpush2.bf16.msra.mxu0 0
    %779 = vmatprep.subr.bf16.mxu0 0
    %780 = vmatpush2.bf16.msra.mxu0 0
    %781 = vmatprep.subr.bf16.mxu0 0
    %782 = vmatpush2.bf16.msra.mxu0 0
    %783 = vmatprep.subr.bf16.mxu0 0
    %784 = vmatpush2.bf16.msra.mxu0 0
    %785 = vmatprep.subr.bf16.mxu0 0
    %786 = vmatpush2.bf16.msra.mxu0 0
    %787 = vmatprep.subr.bf16.mxu0 0
    %788 = vmatpush2.bf16.msra.mxu0 0
    %789 = vmatprep.subr.bf16.mxu0 0
    %790 = vmatpush2.bf16.msra.mxu0 0
    %791 = vmatprep.mubr.bf16.mxu0 0
    %792 = vmatmul.mubr.bf16.gmra.mxu0 %v757
    %v793 = vpop.f32.mrf.mxu0
    %v794 = vadd.f32 %v351, %v793
    %v795 = vpop.f32.mrf.mxu0
    %v796 = vpop.f32.mrf.mxu0
    %v797 = vpop.f32.mrf.mxu0
    %798 = vdwg.mxu0
    %v799 = vtanh.pop %v794
    %v800 = vadd.f32 %v708, %v799
    %s801 = scalar_lea.vmem %s3, 1
    %802 = vst [vmem:[%s801] sm:$0x1] %v800
    // Predicated region
    $region18: #{_fused_forward.1} parent=1 // pred_check
      _
    $region19: #{_fused_forward.1} parent=1 // pred_check_branch
      %804 = sbr.rel (0) target = $region21
    $region20: #{_fused_forward.1} parent=1 // pred_region
      _
    $region21: #{_fused_forward.1} parent=1 // pred_fallthru
      _
    // Predicated region
    $region22: #{_fused_forward.1} parent=1 // pred_check
      _
    $region23: #{_fused_forward.1} parent=1 // pred_check_branch
      %806 = sbr.rel (0) target = $region25
    $region24: #{_fused_forward.1} parent=1 // pred_region
      _
    $region25: #{_fused_forward.1} parent=1 // pred_fallthru
      _
    %807 = vsyncpa [#allocation3], 1

</llo_original>
